<compile_context>
chip_gen: v7x
topology: tpu7x:2x2x1
jax: 0.10.0
libtpu: 0.0.40
codegen_flags: <defaults>
</compile_context>

<pallas_src>
import jax
import jax.numpy as jnp
from jax.experimental import pallas as pl

block_size = 8
embedding_size = 3
head_size = 3
dropout_rate = 0.1       # identity in eval mode
LANE = 128               # padded (lane-dense) head dim used inside the kernel
NEG_INF = -1e30          # finite mask fill value


def head_kernel(x_ref, wqkv_ref, o_ref):
    B, T, C = x_ref.shape
    Hp = o_ref.shape[-1]                                  # padded head dim (128)

    x2 = x_ref[...].reshape(B * T, C)                     # (B*T, C)
    w_qkv = wqkv_ref[...]                                 # (C, 3*Hp)

    # Single fused QKV projection: one MXU matmul instead of three.
    qkv = jnp.dot(x2, w_qkv, preferred_element_type=jnp.float32)   # (B*T, 3*Hp)
    q = qkv[:, 0 * Hp:1 * Hp].reshape(B, T, Hp)
    k = qkv[:, 1 * Hp:2 * Hp].reshape(B, T, Hp)
    v = qkv[:, 2 * Hp:3 * Hp].reshape(B, T, Hp)

    # Scaled dot-product scores.  NOTE: the PyTorch module scales by C
    # (embedding size) -- we follow the module spec exactly.
    att = jnp.einsum("btd,bsd->bts", q, k,
                     preferred_element_type=jnp.float32) * (C ** -0.5)

    # Causal (lower-triangular) mask, built once per invocation, finite fill.
    row = jax.lax.broadcasted_iota(jnp.int32, (T, T), 0)
    col = jax.lax.broadcasted_iota(jnp.int32, (T, T), 1)
    att = jnp.where(col <= row, att, NEG_INF)

    # Numerically stable softmax; reciprocal goes to the EUP slot (approx).
    att = att - jnp.max(att, axis=-1, keepdims=True)
    p = jnp.exp(att)
    p = p * pl.reciprocal(jnp.sum(p, axis=-1, keepdims=True), approx=True)

    # TODO(synk): training-mode dropout on attention weights omitted (eval mode => identity).

    o_ref[...] = jnp.einsum("bts,bsd->btd", p, v,
                            preferred_element_type=jnp.float32).astype(o_ref.dtype)


def head_forward(x, w_key, w_query, w_value):
    """x: (B, T, C) float32; w_*: (H, C) float32 (PyTorch nn.Linear layout)."""
    B, T, C = x.shape
    H = w_key.shape[0]
    Hp = LANE

    def prep(w):  # (H, C) -> (C, Hp), transposed and zero-padded to a full lane width
        wt = jnp.asarray(w, jnp.float32).T                # (C, H)
        return jnp.pad(wt, ((0, 0), (0, Hp - H)))         # (C, Hp)

    # Fused, padded QKV weight: (C, 3*Hp), column blocks = [Q | K | V].
    w_qkv = jnp.concatenate([prep(w_query), prep(w_key), prep(w_value)], axis=1)

    # Gridless pallas_call: whole arrays live in VMEM, single invocation.
    out = pl.pallas_call(
        head_kernel,
        out_shape=jax.ShapeDtypeStruct((B, T, Hp), jnp.float32),
    )(x, w_qkv)

    return out[:, :, :H]                                  # un-pad the lane dim


def head_reference(x, w_key, w_query, w_value):
    """Plain-JAX reference replicating the PyTorch Head.forward (eval mode)."""
    B, T, C = x.shape
    k = x @ w_key.T
    q = x @ w_query.T
    v = x @ w_value.T
    att = jnp.einsum("btd,bsd->bts", q, k) * (C ** -0.5)
    mask = jnp.tril(jnp.ones((T, T), dtype=bool))
    att = jnp.where(mask, att, -jnp.inf)
    att = jax.nn.softmax(att, axis=-1)
    return jnp.einsum("bts,bsd->btd", att, v)


if __name__ == "__main__":
    key = jax.random.PRNGKey(0)
    kx, kk, kq, kv = jax.random.split(key, 4)

    B, T, C, H = 2, block_size, embedding_size, head_size
    x = jax.random.normal(kx, (B, T, C), dtype=jnp.float32)

    # deterministic parameter init (kaiming-uniform-like bound, seeded)
    bound = 1.0 / (C ** 0.5)
    w_key = jax.random.uniform(kk, (H, C), jnp.float32, -bound, bound)
    w_query = jax.random.uniform(kq, (H, C), jnp.float32, -bound, bound)
    w_value = jax.random.uniform(kv, (H, C), jnp.float32, -bound, bound)

    out = jax.block_until_ready(head_forward(x, w_key, w_query, w_value))
    ref = head_reference(x, w_key, w_query, w_value)

    assert out.shape == (B, T, H)
    # tolerance accommodates the EUP approximate reciprocal in the softmax
    assert jnp.allclose(out, ref, atol=2e-3, rtol=2e-3)

    print("KERNEL_OK")
</pallas_src>

<mosaic_0001>
module attributes {stable_mosaic.version = 11 : i64} {
  func.func @head_kernel(%arg0: memref<2x8x3xf32, #tpu.memory_space<vmem>>, %arg1: memref<3x384xf32, #tpu.memory_space<vmem>>, %arg2: memref<2x8x128xf32, #tpu.memory_space<vmem>>) attributes {dimension_semantics = [], scalar_prefetch = 0 : i64, scratch_operands = 0 : i64, tpu.core_type = #tpu.core_type<tc>} {
    %c0 = arith.constant 0 : index
    %c0_0 = arith.constant 0 : index
    %c0_1 = arith.constant 0 : index
    %0 = vector.load %arg0[%c0, %c0_0, %c0_1] : memref<2x8x3xf32, #tpu.memory_space<vmem>>, vector<2x8x3xf32>
    %1 = vector.shape_cast %0 : vector<2x8x3xf32> to vector<16x3xf32>
    %c0_2 = arith.constant 0 : index
    %c0_3 = arith.constant 0 : index
    %2 = vector.load %arg1[%c0_2, %c0_3] : memref<3x384xf32, #tpu.memory_space<vmem>>, vector<3x384xf32>
    %cst = arith.constant dense<0.000000e+00> : vector<16x384xf32>
    %3 = tpu.matmul %1, %2, %cst {dimension_numbers = #tpu.dot_dimension_numbers<[1], [0], [0], [1], [0, 0, 1, 1], [], []>} : vector<16x3xf32>, vector<3x384xf32>, vector<16x384xf32> -> vector<16x384xf32>
    %4 = vector.extract_strided_slice %3 {offsets = [0, 0], sizes = [16, 128], strides = [1, 1]} : vector<16x384xf32> to vector<16x128xf32>
    %5 = vector.shape_cast %4 : vector<16x128xf32> to vector<2x8x128xf32>
    %6 = vector.extract_strided_slice %3 {offsets = [0, 128], sizes = [16, 128], strides = [1, 1]} : vector<16x384xf32> to vector<16x128xf32>
    %7 = vector.shape_cast %6 : vector<16x128xf32> to vector<2x8x128xf32>
    %8 = vector.extract_strided_slice %3 {offsets = [0, 256], sizes = [16, 128], strides = [1, 1]} : vector<16x384xf32> to vector<16x128xf32>
    %9 = vector.shape_cast %8 : vector<16x128xf32> to vector<2x8x128xf32>
    "tpu.trace_start"() <{level = 10 : i32, message = "btd,bsd->bts"}> : () -> ()
    %cst_4 = arith.constant dense<0.000000e+00> : vector<2x8x8xf32>
    %10 = tpu.matmul %5, %7, %cst_4 {dimension_numbers = #tpu.dot_dimension_numbers<[2], [2], [1], [1], [0, 0, 0, 1, 1, 1], [0], [0]>} : vector<2x8x128xf32>, vector<2x8x128xf32>, vector<2x8x8xf32> -> vector<2x8x8xf32>
    "tpu.trace_stop"() : () -> ()
    %cst_5 = arith.constant 0.577350259 : f32
    %11 = vector.broadcast %cst_5 : f32 to vector<2x8x8xf32>
    %12 = arith.mulf %10, %11 : vector<2x8x8xf32>
    %13 = tpu.iota {dimensions = array<i32: 0>} : vector<8x8xi32>
    %14 = tpu.iota {dimensions = array<i32: 1>} : vector<8x8xi32>
    %15 = arith.cmpi sle, %14, %13 : vector<8x8xi32>
    %cst_6 = arith.constant -1.000000e+30 : f32
    %16 = vector.shape_cast %15 : vector<8x8xi1> to vector<1x8x8xi1>
    %17 = vector.broadcast %16 : vector<1x8x8xi1> to vector<2x8x8xi1>
    %18 = vector.broadcast %cst_6 : f32 to vector<2x8x8xf32>
    %19 = arith.select %17, %12, %18 : vector<2x8x8xi1>, vector<2x8x8xf32>
    %cst_7 = arith.constant dense<0xFF800000> : vector<2x8xf32>
    %20 = vector.multi_reduction <maximumf>, %19, %cst_7 [2] : vector<2x8x8xf32> to vector<2x8xf32>
    %21 = vector.shape_cast %20 : vector<2x8xf32> to vector<2x8x1xf32>
    %22 = vector.broadcast %21 : vector<2x8x1xf32> to vector<2x8x8xf32>
    %23 = arith.subf %19, %22 : vector<2x8x8xf32>
    %24 = math.exp %23 : vector<2x8x8xf32>
    %cst_8 = arith.constant dense<0.000000e+00> : vector<2x8xf32>
    %25 = vector.multi_reduction <add>, %24, %cst_8 [2] : vector<2x8x8xf32> to vector<2x8xf32>
    %26 = vector.shape_cast %25 : vector<2x8xf32> to vector<2x8x1xf32>
    %27 = tpu.reciprocal %26 {approx = true} : vector<2x8x1xf32> -> vector<2x8x1xf32>
    %28 = vector.broadcast %27 : vector<2x8x1xf32> to vector<2x8x8xf32>
    %29 = arith.mulf %24, %28 : vector<2x8x8xf32>
    "tpu.trace_start"() <{level = 10 : i32, message = "bts,bsd->btd"}> : () -> ()
    %cst_9 = arith.constant dense<0.000000e+00> : vector<2x8x128xf32>
    %30 = tpu.matmul %29, %9, %cst_9 {dimension_numbers = #tpu.dot_dimension_numbers<[2], [1], [1], [2], [0, 0, 0, 1, 1, 2], [0], [0]>} : vector<2x8x8xf32>, vector<2x8x128xf32>, vector<2x8x128xf32> -> vector<2x8x128xf32>
    "tpu.trace_stop"() : () -> ()
    %c0_10 = arith.constant 0 : index
    %c0_11 = arith.constant 0 : index
    %c0_12 = arith.constant 0 : index
    %31 = vector.load %arg2[%c0_10, %c0_11, %c0_12] : memref<2x8x128xf32, #tpu.memory_space<vmem>>, vector<2x8x128xf32>
    tpu.vector_store %arg2[%c0_10, %c0_11, %c0_12], %30 {strides = array<i32>} : memref<2x8x128xf32, #tpu.memory_space<vmem>>, vector<2x8x128xf32>,
    return
  }
}

</mosaic_0001>

<llo_original>
// kernel: tpu_custom_call.1
$region0: #{tpu_custom_call.1}
  #allocation0 [shape = 'u32[]', space=smem, size = 0x4, offset = 0x4, fixed_abs, tag = 'smem constant byte address 0x4 - core index']
  #allocation1 [shape = 'u32[144,128]{1,0:T(1,128)}', space=vmem, size = 0x12000, scoped, tag = 'internal scratch']
  %s0 = inlined_call_operand.vmem [shape: f32[2,8,3], index: 0, kind: input, shape index: {}]
  %s1 = inlined_call_operand.vmem [shape: f32[3,384], index: 1, kind: input, shape index: {}]
  %s2 = inlined_call_operand.hbm [shape: f32[2,8,128], index: 2, kind: output, shape index: {}]
  %s3 = sld [smem:[#allocation0]]
  $region18: #{tpu_custom_call.1} parent=0
    _
  %s5 = ssub.s32 1, %s3
  %s6 = scalar_select 0, %s5, %s3
  $region1: #{tpu_custom_call.1} parent=0
    #allocation2 [shape = 'u8[8192]{0}', space=vmem, size = 0x2000, scoped, tag = 'output window, operand 0, single buffered']
    #allocation3 [shape = 's32[1]{0}', space=sflag, size = 0x4, scoped, tag = 'scoped memory for tpu_custom_call.1']
    %7 = vsyncpa [#allocation3], 0
    // Predicated region
    $region2: #{tpu_custom_call.1} parent=1 // pred_check
      _
    $region3: #{tpu_custom_call.1} parent=1 // pred_check_branch
      %9 = sbr.rel (0) target = $region5
    $region4: #{tpu_custom_call.1} parent=1 // pred_region
      _
    $region5: #{tpu_custom_call.1} parent=1 // pred_fallthru
      _
    // Predicated region
    $region6: #{tpu_custom_call.1} parent=1 // pred_check
      _
    $region7: #{tpu_custom_call.1} parent=1 // pred_check_branch
      %11 = sbr.rel (0) target = $region9
    $region8: #{tpu_custom_call.1} parent=1 // pred_region
      _
    $region9: #{tpu_custom_call.1} parent=1 // pred_fallthru
      _
    %v12 = vld [vmem:[%s0] sm:$0xff]
    %v13 = vld [vmem:[%s0 + $0x8] sm:$0xff]
    %v14 = vld [vmem:[%s1] sm:$0x77]
    %v15 = vld [vmem:[%s1 + $0x8] sm:$0x7]
    %v18 = vcombine.high %v14, %v14
    %vm19 = vcmask 23552
    %v21 = vsel %vm19, %v12, 0
    %v24 = vsel %vm19, %v13, 0
    %vm26 = vcmask 1042432
    %v27 = vsel %vm26, %v14, 0
    %v29 = vsel %vm26, %v18, 0
    %v31 = vsel %vm26, %v15, 0
    %33 = vmatprep.subr.mxu0 %v29
    %34 = vmatpush1.msra.mxu0 %v27
    %35 = vmatprep.subr.mxu0 0.0
    %36 = vmatpush1.msra.mxu0 0.0
    %37 = vmatprep.subr.mxu0 0.0
    %38 = vmatpush1.msra.mxu0 0.0
    %39 = vmatprep.subr.mxu0 0.0
    %40 = vmatpush1.msra.mxu0 0.0
    %41 = vmatprep.subr.mxu0 0.0
    %42 = vmatpush1.msra.mxu0 0.0
    %43 = vmatprep.subr.mxu0 0.0
    %44 = vmatpush1.msra.mxu0 0.0
    %45 = vmatprep.subr.mxu0 0.0
    %46 = vmatpush1.msra.mxu0 0.0
    %47 = vmatprep.subr.mxu0 0.0
    %48 = vmatpush1.msra.mxu0 0.0
    %49 = vmatprep.subr.mxu0 0.0
    %50 = vmatpush1.msra.mxu0 0.0
    %51 = vmatprep.subr.mxu0 0.0
    %52 = vmatpush1.msra.mxu0 0.0
    %53 = vmatprep.subr.mxu0 0.0
    %54 = vmatpush1.msra.mxu0 0.0
    %55 = vmatprep.subr.mxu0 0.0
    %56 = vmatpush1.msra.mxu0 0.0
    %57 = vmatprep.subr.mxu0 0.0
    %58 = vmatpush1.msra.mxu0 0.0
    %59 = vmatprep.subr.mxu0 0.0
    %60 = vmatpush1.msra.mxu0 0.0
    %61 = vmatprep.subr.mxu0 0.0
    %62 = vmatpush1.msra.mxu0 0.0
    %63 = vmatprep.subr.mxu0 0.0
    %64 = vmatpush1.msra.mxu0 0.0
    %65 = vmatprep.subr.mxu0 0.0
    %66 = vmatpush1.msra.mxu0 0.0
    %67 = vmatprep.subr.mxu0 0.0
    %68 = vmatpush1.msra.mxu0 0.0
    %69 = vmatprep.subr.mxu0 0.0
    %70 = vmatpush1.msra.mxu0 0.0
    %71 = vmatprep.subr.mxu0 0.0
    %72 = vmatpush1.msra.mxu0 0.0
    %73 = vmatprep.subr.mxu0 0.0
    %74 = vmatpush1.msra.mxu0 0.0
    %75 = vmatprep.subr.mxu0 0.0
    %76 = vmatpush1.msra.mxu0 0.0
    %77 = vmatprep.subr.mxu0 0.0
    %78 = vmatpush1.msra.mxu0 0.0
    %79 = vmatprep.subr.mxu0 0.0
    %80 = vmatpush1.msra.mxu0 0.0
    %81 = vmatprep.subr.mxu0 0.0
    %82 = vmatpush1.msra.mxu0 0.0
    %83 = vmatprep.subr.mxu0 0.0
    %84 = vmatpush1.msra.mxu0 0.0
    %85 = vmatprep.subr.mxu0 0.0
    %86 = vmatpush1.msra.mxu0 0.0
    %87 = vmatprep.subr.mxu0 0.0
    %88 = vmatpush1.msra.mxu0 0.0
    %89 = vmatprep.subr.mxu0 0.0
    %90 = vmatpush1.msra.mxu0 0.0
    %91 = vmatprep.subr.mxu0 0.0
    %92 = vmatpush1.msra.mxu0 0.0
    %93 = vmatprep.subr.mxu0 0.0
    %94 = vmatpush1.msra.mxu0 0.0
    %95 = vmatprep.subr.mxu0 0.0
    %96 = vmatpush1.msra.mxu0 0.0
    %97 = vmatprep.mubr.f32.mxu0 0.0
    %98 = vmatmul.mubr.f32.gmra.mrb[0].mxu0 %v21
    %v99 = vpop.f32.mrb[0].mxu0
    %v100 = vadd.f32 0.0, %v99
    %v101 = vpop.f32.mrb[0].mxu0
    %v102 = vadd.f32 0.0, %v101
    %103 = vmatprep.mubr.f32.mxu0 0.0
    %104 = vmatmul.mubr.f32.gmra.mrb[0].mxu0 %v24
    %v105 = vpop.f32.mrb[0].mxu0
    %v106 = vadd.f32 0.0, %v105
    %v107 = vpop.f32.mrb[0].mxu0
    %v108 = vadd.f32 0.0, %v107
    %109 = vdwg.mxu0
    %110 = vmatprep.subr.mxu0 0.0
    %111 = vmatpush1.msra.mxu0 %v31
    %112 = vmatprep.subr.mxu0 0.0
    %113 = vmatpush1.msra.mxu0 0.0
    %114 = vmatprep.subr.mxu0 0.0
    %115 = vmatpush1.msra.mxu0 0.0
    %116 = vmatprep.subr.mxu0 0.0
    %117 = vmatpush1.msra.mxu0 0.0
    %118 = vmatprep.subr.mxu0 0.0
    %119 = vmatpush1.msra.mxu0 0.0
    %120 = vmatprep.subr.mxu0 0.0
    %121 = vmatpush1.msra.mxu0 0.0
    %122 = vmatprep.subr.mxu0 0.0
    %123 = vmatpush1.msra.mxu0 0.0
    %124 = vmatprep.subr.mxu0 0.0
    %125 = vmatpush1.msra.mxu0 0.0
    %126 = vmatprep.subr.mxu0 0.0
    %127 = vmatpush1.msra.mxu0 0.0
    %128 = vmatprep.subr.mxu0 0.0
    %129 = vmatpush1.msra.mxu0 0.0
    %130 = vmatprep.subr.mxu0 0.0
    %131 = vmatpush1.msra.mxu0 0.0
    %132 = vmatprep.subr.mxu0 0.0
    %133 = vmatpush1.msra.mxu0 0.0
    %134 = vmatprep.subr.mxu0 0.0
    %135 = vmatpush1.msra.mxu0 0.0
    %136 = vmatprep.subr.mxu0 0.0
    %137 = vmatpush1.msra.mxu0 0.0
    %138 = vmatprep.subr.mxu0 0.0
    %139 = vmatpush1.msra.mxu0 0.0
    %140 = vmatprep.subr.mxu0 0.0
    %141 = vmatpush1.msra.mxu0 0.0
    %142 = vmatprep.subr.mxu0 0.0
    %143 = vmatpush1.msra.mxu0 0.0
    %144 = vmatprep.subr.mxu0 0.0
    %145 = vmatpush1.msra.mxu0 0.0
    %146 = vmatprep.subr.mxu0 0.0
    %147 = vmatpush1.msra.mxu0 0.0
    %148 = vmatprep.subr.mxu0 0.0
    %149 = vmatpush1.msra.mxu0 0.0
    %150 = vmatprep.subr.mxu0 0.0
    %151 = vmatpush1.msra.mxu0 0.0
    %152 = vmatprep.subr.mxu0 0.0
    %153 = vmatpush1.msra.mxu0 0.0
    %154 = vmatprep.subr.mxu0 0.0
    %155 = vmatpush1.msra.mxu0 0.0
    %156 = vmatprep.subr.mxu0 0.0
    %157 = vmatpush1.msra.mxu0 0.0
    %158 = vmatprep.subr.mxu0 0.0
    %159 = vmatpush1.msra.mxu0 0.0
    %160 = vmatprep.subr.mxu0 0.0
    %161 = vmatpush1.msra.mxu0 0.0
    %162 = vmatprep.subr.mxu0 0.0
    %163 = vmatpush1.msra.mxu0 0.0
    %164 = vmatprep.subr.mxu0 0.0
    %165 = vmatpush1.msra.mxu0 0.0
    %166 = vmatprep.subr.mxu0 0.0
    %167 = vmatpush1.msra.mxu0 0.0
    %168 = vmatprep.subr.mxu0 0.0
    %169 = vmatpush1.msra.mxu0 0.0
    %170 = vmatprep.subr.mxu0 0.0
    %171 = vmatpush1.msra.mxu0 0.0
    %172 = vmatprep.subr.mxu0 0.0
    %173 = vmatpush1.msra.mxu0 0.0
    %174 = vmatprep.mubr.f32.mxu0 0.0
    %175 = vmatmul.mubr.f32.gmra.mrb[0].mxu0 %v21
    %v176 = vpop.f32.mrb[0].mxu0
    %v177 = vadd.f32 0.0, %v176
    %v178 = vpop.f32.mrb[0].mxu0
    %179 = vmatprep.mubr.f32.mxu0 0.0
    %180 = vmatmul.mubr.f32.gmra.mrb[0].mxu0 %v24
    %v181 = vpop.f32.mrb[0].mxu0
    %v182 = vadd.f32 0.0, %v181
    %v183 = vpop.f32.mrb[0].mxu0
    %184 = vdwg.mxu0
    %185 = vmatprep.subr.mxu0 0.0
    %186 = vmatpush1.xpose.msra.mxu0 %v102
    %187 = vmatprep.subr.mxu0 0.0
    %188 = vmatpush1.xpose.msra.mxu0 0.0
    %189 = vmatprep.subr.mxu0 0.0
    %190 = vmatpush1.xpose.msra.mxu0 0.0
    %191 = vmatprep.subr.mxu0 0.0
    %192 = vmatpush1.xpose.msra.mxu0 0.0
    %193 = vmatprep.subr.mxu0 0.0
    %194 = vmatpush1.xpose.msra.mxu0 0.0
    %195 = vmatprep.subr.mxu0 0.0
    %196 = vmatpush1.xpose.msra.mxu0 0.0
    %197 = vmatprep.subr.mxu0 0.0
    %198 = vmatpush1.xpose.msra.mxu0 0.0
    %199 = vmatprep.subr.mxu0 0.0
    %200 = vmatpush1.xpose.msra.mxu0 0.0
    %201 = vmatprep.subr.mxu0 0.0
    %202 = vmatpush1.xpose.msra.mxu0 0.0
    %203 = vmatprep.subr.mxu0 0.0
    %204 = vmatpush1.xpose.msra.mxu0 0.0
    %205 = vmatprep.subr.mxu0 0.0
    %206 = vmatpush1.xpose.msra.mxu0 0.0
    %207 = vmatprep.subr.mxu0 0.0
    %208 = vmatpush1.xpose.msra.mxu0 0.0
    %209 = vmatprep.subr.mxu0 0.0
    %210 = vmatpush1.xpose.msra.mxu0 0.0
    %211 = vmatprep.subr.mxu0 0.0
    %212 = vmatpush1.xpose.msra.mxu0 0.0
    %213 = vmatprep.subr.mxu0 0.0
    %214 = vmatpush1.xpose.msra.mxu0 0.0
    %215 = vmatprep.subr.mxu0 0.0
    %216 = vmatpush1.xpose.msra.mxu0 0.0
    %217 = vmatprep.subr.mxu0 0.0
    %218 = vmatpush1.xpose.msra.mxu0 0.0
    %219 = vmatprep.subr.mxu0 0.0
    %220 = vmatpush1.xpose.msra.mxu0 0.0
    %221 = vmatprep.subr.mxu0 0.0
    %222 = vmatpush1.xpose.msra.mxu0 0.0
    %223 = vmatprep.subr.mxu0 0.0
    %224 = vmatpush1.xpose.msra.mxu0 0.0
    %225 = vmatprep.subr.mxu0 0.0
    %226 = vmatpush1.xpose.msra.mxu0 0.0
    %227 = vmatprep.subr.mxu0 0.0
    %228 = vmatpush1.xpose.msra.mxu0 0.0
    %229 = vmatprep.subr.mxu0 0.0
    %230 = vmatpush1.xpose.msra.mxu0 0.0
    %231 = vmatprep.subr.mxu0 0.0
    %232 = vmatpush1.xpose.msra.mxu0 0.0
    %233 = vmatprep.subr.mxu0 0.0
    %234 = vmatpush1.xpose.msra.mxu0 0.0
    %235 = vmatprep.subr.mxu0 0.0
    %236 = vmatpush1.xpose.msra.mxu0 0.0
    %237 = vmatprep.subr.mxu0 0.0
    %238 = vmatpush1.xpose.msra.mxu0 0.0
    %239 = vmatprep.subr.mxu0 0.0
    %240 = vmatpush1.xpose.msra.mxu0 0.0
    %241 = vmatprep.subr.mxu0 0.0
    %242 = vmatpush1.xpose.msra.mxu0 0.0
    %243 = vmatprep.subr.mxu0 0.0
    %244 = vmatpush1.xpose.msra.mxu0 0.0
    %245 = vmatprep.subr.mxu0 0.0
    %246 = vmatpush1.xpose.msra.mxu0 0.0
    %247 = vmatprep.subr.mxu0 0.0
    %248 = vmatpush1.xpose.msra.mxu0 0.0
    %249 = vmatprep.mubr.f32.mxu0 0.0
    %250 = vmatmul.mubr.f32.gmra.mrb[0].mxu0 %v100
    %v251 = vpop.f32.mrb[0].mxu0
    %v252 = vadd.f32 0.0, %v251
    %v253 = vpop.f32.mrb[0].mxu0
    %254 = vdwg.mxu0
    %255 = vmatprep.subr.mxu0 0.0
    %256 = vmatpush1.xpose.msra.mxu0 %v108
    %257 = vmatprep.subr.mxu0 0.0
    %258 = vmatpush1.xpose.msra.mxu0 0.0
    %259 = vmatprep.subr.mxu0 0.0
    %260 = vmatpush1.xpose.msra.mxu0 0.0
    %261 = vmatprep.subr.mxu0 0.0
    %262 = vmatpush1.xpose.msra.mxu0 0.0
    %263 = vmatprep.subr.mxu0 0.0
    %264 = vmatpush1.xpose.msra.mxu0 0.0
    %265 = vmatprep.subr.mxu0 0.0
    %266 = vmatpush1.xpose.msra.mxu0 0.0
    %267 = vmatprep.subr.mxu0 0.0
    %268 = vmatpush1.xpose.msra.mxu0 0.0
    %269 = vmatprep.subr.mxu0 0.0
    %270 = vmatpush1.xpose.msra.mxu0 0.0
    %271 = vmatprep.subr.mxu0 0.0
    %272 = vmatpush1.xpose.msra.mxu0 0.0
    %273 = vmatprep.subr.mxu0 0.0
    %274 = vmatpush1.xpose.msra.mxu0 0.0
    %275 = vmatprep.subr.mxu0 0.0
    %276 = vmatpush1.xpose.msra.mxu0 0.0
    %277 = vmatprep.subr.mxu0 0.0
    %278 = vmatpush1.xpose.msra.mxu0 0.0
    %279 = vmatprep.subr.mxu0 0.0
    %280 = vmatpush1.xpose.msra.mxu0 0.0
    %281 = vmatprep.subr.mxu0 0.0
    %282 = vmatpush1.xpose.msra.mxu0 0.0
    %283 = vmatprep.subr.mxu0 0.0
    %284 = vmatpush1.xpose.msra.mxu0 0.0
    %285 = vmatprep.subr.mxu0 0.0
    %286 = vmatpush1.xpose.msra.mxu0 0.0
    %287 = vmatprep.subr.mxu0 0.0
    %288 = vmatpush1.xpose.msra.mxu0 0.0
    %289 = vmatprep.subr.mxu0 0.0
    %290 = vmatpush1.xpose.msra.mxu0 0.0
    %291 = vmatprep.subr.mxu0 0.0
    %292 = vmatpush1.xpose.msra.mxu0 0.0
    %293 = vmatprep.subr.mxu0 0.0
    %294 = vmatpush1.xpose.msra.mxu0 0.0
    %295 = vmatprep.subr.mxu0 0.0
    %296 = vmatpush1.xpose.msra.mxu0 0.0
    %297 = vmatprep.subr.mxu0 0.0
    %298 = vmatpush1.xpose.msra.mxu0 0.0
    %299 = vmatprep.subr.mxu0 0.0
    %300 = vmatpush1.xpose.msra.mxu0 0.0
    %301 = vmatprep.subr.mxu0 0.0
    %302 = vmatpush1.xpose.msra.mxu0 0.0
    %303 = vmatprep.subr.mxu0 0.0
    %304 = vmatpush1.xpose.msra.mxu0 0.0
    %305 = vmatprep.subr.mxu0 0.0
    %306 = vmatpush1.xpose.msra.mxu0 0.0
    %307 = vmatprep.subr.mxu0 0.0
    %308 = vmatpush1.xpose.msra.mxu0 0.0
    %309 = vmatprep.subr.mxu0 0.0
    %310 = vmatpush1.xpose.msra.mxu0 0.0
    %311 = vmatprep.subr.mxu0 0.0
    %312 = vmatpush1.xpose.msra.mxu0 0.0
    %313 = vmatprep.subr.mxu0 0.0
    %314 = vmatpush1.xpose.msra.mxu0 0.0
    %315 = vmatprep.subr.mxu0 0.0
    %316 = vmatpush1.xpose.msra.mxu0 0.0
    %317 = vmatprep.subr.mxu0 0.0
    %318 = vmatpush1.xpose.msra.mxu0 0.0
    %319 = vmatprep.mubr.f32.mxu0 0.0
    %320 = vmatmul.mubr.f32.gmra.mrb[0].mxu0 %v106
    %v321 = vpop.f32.mrb[0].mxu0
    %v322 = vadd.f32 0.0, %v321
    %v323 = vpop.f32.mrb[0].mxu0
    %324 = vdwg.mxu0
    %v325 = vmul.f32 %v252, 0.57735026
    %v326 = vmul.f32 %v322, 0.57735026
    %v327 = vlaneseq
    %v328 = vshrl.u32 %v327, 7
    %v329 = vlaneseq
    %v330 = vand.u32 %v329, 127
    %vm331 = vcmp.le.s32.totalorder %v330, %v328
    %v332 = vsel %vm331, 1, 0
    %vm333 = vcmp.eq.s32.totalorder %v332, 1
    %v334 = vsel %vm333, %v325, -1e+30
    %v335 = vsel %vm333, %v326, -1e+30
    %vm336 = vcmask 64512
    %v337 = vsel %vm336, %v334, -inf
    %338 = vmax.xlane.f32.xlu0 %v337
    %v339 = vpop.xlane.xlu0 %338
    %v340 = vsel %vm336, %v335, -inf
    %341 = vmax.xlane.f32.xlu0 %v340
    %v342 = vpop.xlane.xlu0 %341
    %v343 = vsub.f32 %v334, %v339
    %v344 = vsub.f32 %v335, %v342
    %v345 = vmul.f32 %v343, 1.442695
    %v346 = vpow.pop %v345
    %v347 = vmul.f32 %v344, 1.442695
    %v348 = vpow.pop %v347
    %v349 = vsel %vm336, %v346, 0.0
    %350 = vadd.xlane.f32.xlu0 %v349
    %v351 = vpop.xlane.xlu0 %350
    %v352 = vsel %vm336, %v348, 0.0
    %353 = vadd.xlane.f32.xlu0 %v352
    %v354 = vpop.xlane.xlu0 %353
    %v355 = vrcp.pop %v351
    %v356 = vrcp.pop %v354
    %v357 = vmul.f32 %v346, %v355
    %v358 = vmul.f32 %v348, %v356
    %v360 = vsel %vm336, %v357, 0
    %362 = vmatprep.subr.mxu0 0.0
    %363 = vmatpush1.msra.mxu0 %v177
    %364 = vmatprep.subr.mxu0 0.0
    %365 = vmatpush1.msra.mxu0 0.0
    %366 = vmatprep.subr.mxu0 0.0
    %367 = vmatpush1.msra.mxu0 0.0
    %368 = vmatprep.subr.mxu0 0.0
    %369 = vmatpush1.msra.mxu0 0.0
    %370 = vmatprep.subr.mxu0 0.0
    %371 = vmatpush1.msra.mxu0 0.0
    %372 = vmatprep.subr.mxu0 0.0
    %373 = vmatpush1.msra.mxu0 0.0
    %374 = vmatprep.subr.mxu0 0.0
    %375 = vmatpush1.msra.mxu0 0.0
    %376 = vmatprep.subr.mxu0 0.0
    %377 = vmatpush1.msra.mxu0 0.0
    %378 = vmatprep.subr.mxu0 0.0
    %379 = vmatpush1.msra.mxu0 0.0
    %380 = vmatprep.subr.mxu0 0.0
    %381 = vmatpush1.msra.mxu0 0.0
    %382 = vmatprep.subr.mxu0 0.0
    %383 = vmatpush1.msra.mxu0 0.0
    %384 = vmatprep.subr.mxu0 0.0
    %385 = vmatpush1.msra.mxu0 0.0
    %386 = vmatprep.subr.mxu0 0.0
    %387 = vmatpush1.msra.mxu0 0.0
    %388 = vmatprep.subr.mxu0 0.0
    %389 = vmatpush1.msra.mxu0 0.0
    %390 = vmatprep.subr.mxu0 0.0
    %391 = vmatpush1.msra.mxu0 0.0
    %392 = vmatprep.subr.mxu0 0.0
    %393 = vmatpush1.msra.mxu0 0.0
    %394 = vmatprep.subr.mxu0 0.0
    %395 = vmatpush1.msra.mxu0 0.0
    %396 = vmatprep.subr.mxu0 0.0
    %397 = vmatpush1.msra.mxu0 0.0
    %398 = vmatprep.subr.mxu0 0.0
    %399 = vmatpush1.msra.mxu0 0.0
    %400 = vmatprep.subr.mxu0 0.0
    %401 = vmatpush1.msra.mxu0 0.0
    %402 = vmatprep.subr.mxu0 0.0
    %403 = vmatpush1.msra.mxu0 0.0
    %404 = vmatprep.subr.mxu0 0.0
    %405 = vmatpush1.msra.mxu0 0.0
    %406 = vmatprep.subr.mxu0 0.0
    %407 = vmatpush1.msra.mxu0 0.0
    %408 = vmatprep.subr.mxu0 0.0
    %409 = vmatpush1.msra.mxu0 0.0
    %410 = vmatprep.subr.mxu0 0.0
    %411 = vmatpush1.msra.mxu0 0.0
    %412 = vmatprep.subr.mxu0 0.0
    %413 = vmatpush1.msra.mxu0 0.0
    %414 = vmatprep.subr.mxu0 0.0
    %415 = vmatpush1.msra.mxu0 0.0
    %416 = vmatprep.subr.mxu0 0.0
    %417 = vmatpush1.msra.mxu0 0.0
    %418 = vmatprep.subr.mxu0 0.0
    %419 = vmatpush1.msra.mxu0 0.0
    %420 = vmatprep.subr.mxu0 0.0
    %421 = vmatpush1.msra.mxu0 0.0
    %422 = vmatprep.subr.mxu0 0.0
    %423 = vmatpush1.msra.mxu0 0.0
    %424 = vmatprep.subr.mxu0 0.0
    %425 = vmatpush1.msra.mxu0 0.0
    %426 = vmatprep.mubr.f32.mxu0 0.0
    %427 = vmatmul.mubr.f32.gmra.mrb[0].mxu0 %v360
    %v428 = vpop.f32.mrb[0].mxu0
    %v429 = vadd.f32 0.0, %v428
    %v430 = vpop.f32.mrb[0].mxu0
    %431 = vdwg.mxu0
    %v433 = vsel %vm336, %v358, 0
    %435 = vmatprep.subr.mxu0 0.0
    %436 = vmatpush1.msra.mxu0 %v182
    %437 = vmatprep.subr.mxu0 0.0
    %438 = vmatpush1.msra.mxu0 0.0
    %439 = vmatprep.subr.mxu0 0.0
    %440 = vmatpush1.msra.mxu0 0.0
    %441 = vmatprep.subr.mxu0 0.0
    %442 = vmatpush1.msra.mxu0 0.0
    %443 = vmatprep.subr.mxu0 0.0
    %444 = vmatpush1.msra.mxu0 0.0
    %445 = vmatprep.subr.mxu0 0.0
    %446 = vmatpush1.msra.mxu0 0.0
    %447 = vmatprep.subr.mxu0 0.0
    %448 = vmatpush1.msra.mxu0 0.0
    %449 = vmatprep.subr.mxu0 0.0
    %450 = vmatpush1.msra.mxu0 0.0
    %451 = vmatprep.subr.mxu0 0.0
    %452 = vmatpush1.msra.mxu0 0.0
    %453 = vmatprep.subr.mxu0 0.0
    %454 = vmatpush1.msra.mxu0 0.0
    %455 = vmatprep.subr.mxu0 0.0
    %456 = vmatpush1.msra.mxu0 0.0
    %457 = vmatprep.subr.mxu0 0.0
    %458 = vmatpush1.msra.mxu0 0.0
    %459 = vmatprep.subr.mxu0 0.0
    %460 = vmatpush1.msra.mxu0 0.0
    %461 = vmatprep.subr.mxu0 0.0
    %462 = vmatpush1.msra.mxu0 0.0
    %463 = vmatprep.subr.mxu0 0.0
    %464 = vmatpush1.msra.mxu0 0.0
    %465 = vmatprep.subr.mxu0 0.0
    %466 = vmatpush1.msra.mxu0 0.0
    %467 = vmatprep.subr.mxu0 0.0
    %468 = vmatpush1.msra.mxu0 0.0
    %469 = vmatprep.subr.mxu0 0.0
    %470 = vmatpush1.msra.mxu0 0.0
    %471 = vmatprep.subr.mxu0 0.0
    %472 = vmatpush1.msra.mxu0 0.0
    %473 = vmatprep.subr.mxu0 0.0
    %474 = vmatpush1.msra.mxu0 0.0
    %475 = vmatprep.subr.mxu0 0.0
    %476 = vmatpush1.msra.mxu0 0.0
    %477 = vmatprep.subr.mxu0 0.0
    %478 = vmatpush1.msra.mxu0 0.0
    %479 = vmatprep.subr.mxu0 0.0
    %480 = vmatpush1.msra.mxu0 0.0
    %481 = vmatprep.subr.mxu0 0.0
    %482 = vmatpush1.msra.mxu0 0.0
    %483 = vmatprep.subr.mxu0 0.0
    %484 = vmatpush1.msra.mxu0 0.0
    %485 = vmatprep.subr.mxu0 0.0
    %486 = vmatpush1.msra.mxu0 0.0
    %487 = vmatprep.subr.mxu0 0.0
    %488 = vmatpush1.msra.mxu0 0.0
    %489 = vmatprep.subr.mxu0 0.0
    %490 = vmatpush1.msra.mxu0 0.0
    %491 = vmatprep.subr.mxu0 0.0
    %492 = vmatpush1.msra.mxu0 0.0
    %493 = vmatprep.subr.mxu0 0.0
    %494 = vmatpush1.msra.mxu0 0.0
    %495 = vmatprep.subr.mxu0 0.0
    %496 = vmatpush1.msra.mxu0 0.0
    %497 = vmatprep.subr.mxu0 0.0
    %498 = vmatpush1.msra.mxu0 0.0
    %499 = vmatprep.mubr.f32.mxu0 0.0
    %500 = vmatmul.mubr.f32.gmra.mrb[0].mxu0 %v433
    %v501 = vpop.f32.mrb[0].mxu0
    %v502 = vadd.f32 0.0, %v501
    %v503 = vpop.f32.mrb[0].mxu0
    %504 = vdwg.mxu0
    %505 = vst [vmem:[#allocation2] sm:$0xff] %v429
    %506 = vst [vmem:[#allocation2 + $0x8] sm:$0xff] %v502
    // Predicated region
    $region10: #{tpu_custom_call.1} parent=1 // pred_check
      _
    $region11: #{tpu_custom_call.1} parent=1 // pred_check_branch
      %508 = sbr.rel (0) target = $region13
    $region12: #{tpu_custom_call.1} parent=1 // pred_region
      %s510 = ssub.s32 256, 256
      %511 = vsyncadd [#allocation3], %s510
      %s512 = sshll.u32 [#allocation2], 4
      %s513 = int_to_ptr.vmem [resolvable:$true] %s512
      %518 = dma.vmem_to_hbm [thread:$0]  %s513, 256, %s2, [#allocation3], 128, 128, 8
    $region13: #{tpu_custom_call.1} parent=1 // pred_fallthru
      _
    // Predicated region
    $region14: #{tpu_custom_call.1} parent=1 // pred_check
      _
    $region15: #{tpu_custom_call.1} parent=1 // pred_check_branch
      %520 = sbr.rel (0) target = $region17
    $region16: #{tpu_custom_call.1} parent=1 // pred_region
      %521 = dma.done [#allocation3], 256
    $region17: #{tpu_custom_call.1} parent=1 // pred_fallthru
      _
    %522 = vsyncpa [#allocation3], 1

</llo_original>
